<compile_context>
chip_gen: v7x
topology: tpu7x:2x2x1
jax: 0.10.0
libtpu: 0.0.40
codegen_flags: <defaults>
</compile_context>

<pallas_src>
import functools

import jax
import jax.numpy as jnp
from jax.experimental import pallas as pl
from jax.experimental.pallas import tpu as pltpu

_LANES = 128
_SUBLANES = 8


def _round_up(x, m):
    return ((x + m - 1) // m) * m


def _batch_dim_semantics():
    """CORE_PARALLEL only changes codegen on multi-TensorCore chips (v7x)."""
    try:
        kind = jax.devices()[0].device_kind.lower()
    except Exception:  # pragma: no cover - defensive
        kind = ""
    if "v7" in kind:
        return (pltpu.CORE_PARALLEL,)
    return ("parallel",)


def qnetwork_kernel(x_ref,
                    w1_ref, b1_ref,
                    w2_ref, b2_ref,
                    w3_ref, b3_ref,
                    w4_ref, b4_ref,
                    w5_ref, b5_ref,
                    o_ref):
    """Fused forward over one batch tile: 4x (Linear + ReLU) + final Linear.

    Weights/biases are whole-array VMEM blocks (resident across the batch grid).
    Matmuls run on the MXU with f32 accumulation; hidden activations are carried
    in the weight dtype (bf16 on the default path) to keep vreg pressure low.
    """
    compute_dtype = w1_ref.dtype

    # Hoisted bias loads / f32 casts (each bias touched once per grid step).
    b1 = b1_ref[...].astype(jnp.float32)
    b2 = b2_ref[...].astype(jnp.float32)
    b3 = b3_ref[...].astype(jnp.float32)
    b4 = b4_ref[...].astype(jnp.float32)
    b5 = b5_ref[...].astype(jnp.float32)

    def linear(h, w_ref, b):
        # Cast activations to the weight dtype (bf16 on default path), accumulate
        # in f32 on the MXU, add f32 bias on the VPU.
        return jnp.dot(h.astype(w_ref.dtype), w_ref[...],
                       preferred_element_type=jnp.float32) + b

    def relu_act(h):
        # ReLU in f32, then carry the activation in the compute dtype.
        return jnp.maximum(h, 0.0).astype(compute_dtype)

    h = relu_act(linear(x_ref[...], w1_ref, b1))
    h = relu_act(linear(h, w2_ref, b2))
    h = relu_act(linear(h, w3_ref, b3))
    h = relu_act(linear(h, w4_ref, b4))
    o_ref[...] = linear(h, w5_ref, b5).astype(o_ref.dtype)


@functools.partial(jax.jit, static_argnames=("block_batch",))
def qnetwork_forward(state, params, *, block_batch=1024):
    """state: [B, state_size] f32; params: (w1,b1,...,w5,b5) with w as [in,out].

    block_batch: batch tile size (default 1024; the kernel is grid-overhead
    bound, so bigger tiles are better until VMEM pressure, on all generations).
    Small batches collapse to a single (padded-to-8-rows) program.
    """
    w1, b1, w2, b2, w3, b3, w4, b4, w5, b5 = params
    batch, state_size = state.shape
    action_size = w5.shape[-1]

    # Pad the final layer so the output slab is lane-dense (last dim a multiple
    # of 128 -> unmasked full-lane stores). Extra columns are zero, sliced off.
    # (On v5e with huge batches an unpadded masked-store output could be worth
    #  benchmarking since 94% of the padded writeback is zeros; lane-dense is
    #  the safe default and the right call on v6e/v7x.)
    out_pad = _round_up(action_size, _LANES)
    if out_pad != action_size:
        w5 = jnp.pad(w5, ((0, 0), (0, out_pad - action_size)))
        b5 = jnp.pad(b5, ((0, 0), (0, out_pad - action_size)))
    padded_params = (w1, b1, w2, b2, w3, b3, w4, b4, w5, b5)

    # Batch tiling: pad B up to a multiple of the tile (tile a multiple of 8).
    tb = min(block_batch, _round_up(batch, _SUBLANES))
    tb = _round_up(tb, _SUBLANES)
    b_pad = _round_up(batch, tb)
    x = state if b_pad == batch else jnp.pad(state, ((0, b_pad - batch), (0, 0)))

    x_spec = pl.BlockSpec((tb, state_size), lambda i: (i, 0))
    # Weights/biases: same block every grid step -> stay resident in VMEM.
    weight_specs = [pl.BlockSpec(p.shape, lambda i: (0, 0)) for p in padded_params]
    out_spec = pl.BlockSpec((tb, out_pad), lambda i: (i, 0))

    out = pl.pallas_call(
        qnetwork_kernel,
        out_shape=jax.ShapeDtypeStruct((b_pad, out_pad), jnp.float32),
        grid=(b_pad // tb,),
        in_specs=[x_spec] + weight_specs,
        out_specs=out_spec,
        compiler_params=pltpu.CompilerParams(
            # Batch tiles are independent; CORE_PARALLEL shards them across the
            # two TensorCores on v7x, "parallel" elsewhere.
            dimension_semantics=_batch_dim_semantics(),
        ),
    )(x, *padded_params)

    return out[:batch, :action_size]


def init_params(key, state_size, action_size,
                fc1=256, fc2=256, fc3=256, fc4=256, fc5=256,
                param_dtype=jnp.bfloat16):
    """Init mimicking PyTorch nn.Linear default: U(-1/sqrt(fan_in), 1/sqrt(fan_in)).

    Weights stored as [in, out] (transposed w.r.t. PyTorch's [out, in]). Default
    weight dtype is bf16 (native MXU path on all generations, halves weight DMA);
    pass param_dtype=jnp.float32 for full-precision weights. Biases stay f32.
    """
    dims = [(state_size, fc1), (fc1, fc2), (fc2, fc3), (fc3, fc4), (fc4, action_size)]
    params = []
    for fan_in, fan_out in dims:
        key, kw, kb = jax.random.split(key, 3)
        bound = 1.0 / jnp.sqrt(jnp.float32(fan_in))
        w = jax.random.uniform(kw, (fan_in, fan_out), jnp.float32, -bound, bound)
        b = jax.random.uniform(kb, (1, fan_out), jnp.float32, -bound, bound)
        params += [w.astype(param_dtype), b]
    return tuple(params)


def reference_forward(state, params):
    """Plain-JAX reference matching the kernel's math: activations cast to the
    weight dtype before each matmul, f32 accumulation, f32 bias, activations
    carried in the weight dtype after ReLU."""
    w1, b1, w2, b2, w3, b3, w4, b4, w5, b5 = params
    cdt = w1.dtype

    def lin(h, w, b):
        return jnp.dot(h.astype(w.dtype), w,
                       preferred_element_type=jnp.float32) + b.astype(jnp.float32)

    def act(h):
        return jnp.maximum(h, 0.0).astype(cdt)

    h = act(lin(state, w1, b1))
    h = act(lin(h, w2, b2))
    h = act(lin(h, w3, b3))
    h = act(lin(h, w4, b4))
    return lin(h, w5, b5)


if __name__ == "__main__":
    key = jax.random.PRNGKey(0)
    state_size, action_size = 32, 8

    key, k_state, k_params = jax.random.split(key, 3)

    # --- Test 1: default bf16 weights, tiny inference batch (single program) ---
    params_bf16 = init_params(k_params, state_size, action_size)  # bf16 default
    state_small = jax.random.normal(k_state, (8, state_size), jnp.float32)
    out1 = jax.block_until_ready(qnetwork_forward(state_small, params_bf16))
    ref1 = reference_forward(state_small, params_bf16)
    assert out1.shape == (8, action_size), out1.shape
    assert jnp.allclose(out1, ref1, atol=5e-2, rtol=5e-2), "bf16 small-batch mismatch"

    # --- Test 2: bf16 weights, batch not a multiple of the tile, small tile to
    #             exercise the multi-step grid + padding path ---
    key, k_state2 = jax.random.split(key)
    state_big = jax.random.normal(k_state2, (300, state_size), jnp.float32)
    out2 = jax.block_until_ready(qnetwork_forward(state_big, params_bf16, block_batch=128))
    ref2 = reference_forward(state_big, params_bf16)
    assert out2.shape == (300, action_size), out2.shape
    assert jnp.allclose(out2, ref2, atol=5e-2, rtol=5e-2), "bf16 tiled-batch mismatch"

    # --- Test 3: bf16 weights, default (large) batch tile ---
    out3 = jax.block_until_ready(qnetwork_forward(state_big, params_bf16))
    assert out3.shape == (300, action_size), out3.shape
    assert jnp.allclose(out3, ref2, atol=5e-2, rtol=5e-2), "bf16 large-tile mismatch"

    # --- Test 4: f32 weights (opt-in), default tile ---
    params_f32 = init_params(k_params, state_size, action_size, param_dtype=jnp.float32)
    out4 = jax.block_until_ready(qnetwork_forward(state_big, params_f32))
    ref4 = reference_forward(state_big, params_f32)
    assert out4.shape == (300, action_size), out4.shape
    assert jnp.allclose(out4, ref4, atol=2e-3, rtol=2e-3), "f32 mismatch"

    print("KERNEL_OK")
</pallas_src>

<mosaic_0001>
module attributes {stable_mosaic.version = 11 : i64} {
  func.func @qnetwork_kernel(%arg0: i32, %arg1: memref<8x32xf32, #tpu.memory_space<vmem>>, %arg2: memref<32x256xbf16, #tpu.memory_space<vmem>>, %arg3: memref<1x256xf32, #tpu.memory_space<vmem>>, %arg4: memref<256x256xbf16, #tpu.memory_space<vmem>>, %arg5: memref<1x256xf32, #tpu.memory_space<vmem>>, %arg6: memref<256x256xbf16, #tpu.memory_space<vmem>>, %arg7: memref<1x256xf32, #tpu.memory_space<vmem>>, %arg8: memref<256x256xbf16, #tpu.memory_space<vmem>>, %arg9: memref<1x256xf32, #tpu.memory_space<vmem>>, %arg10: memref<256x128xbf16, #tpu.memory_space<vmem>>, %arg11: memref<1x128xf32, #tpu.memory_space<vmem>>, %arg12: memref<8x128xf32, #tpu.memory_space<vmem>>) attributes {dimension_semantics = [#tpu.dimension_semantics<parallel>], iteration_bounds = array<i64: 1>, scalar_prefetch = 0 : i64, scratch_operands = 0 : i64, tpu.core_type = #tpu.core_type<tc>, window_params = [{transform_indices = @transform_0, window_bounds = array<i64: 8, 32>}, {pipeline_mode = #tpu.pipeline_mode<synchronous>, transform_indices = @transform_1, window_bounds = array<i64: 32, 256>}, {pipeline_mode = #tpu.pipeline_mode<synchronous>, transform_indices = @transform_2, window_bounds = array<i64: 1, 256>}, {pipeline_mode = #tpu.pipeline_mode<synchronous>, transform_indices = @transform_3, window_bounds = array<i64: 256, 256>}, {pipeline_mode = #tpu.pipeline_mode<synchronous>, transform_indices = @transform_4, window_bounds = array<i64: 1, 256>}, {pipeline_mode = #tpu.pipeline_mode<synchronous>, transform_indices = @transform_5, window_bounds = array<i64: 256, 256>}, {pipeline_mode = #tpu.pipeline_mode<synchronous>, transform_indices = @transform_6, window_bounds = array<i64: 1, 256>}, {pipeline_mode = #tpu.pipeline_mode<synchronous>, transform_indices = @transform_7, window_bounds = array<i64: 256, 256>}, {pipeline_mode = #tpu.pipeline_mode<synchronous>, transform_indices = @transform_8, window_bounds = array<i64: 1, 256>}, {pipeline_mode = #tpu.pipeline_mode<synchronous>, transform_indices = @transform_9, window_bounds = array<i64: 256, 128>}, {pipeline_mode = #tpu.pipeline_mode<synchronous>, transform_indices = @transform_10, window_bounds = array<i64: 1, 128>}, {transform_indices = @transform_11, window_bounds = array<i64: 8, 128>}]} {
    %c0 = arith.constant 0 : index
    %c0_0 = arith.constant 0 : index
    %0 = vector.load %arg3[%c0, %c0_0] : memref<1x256xf32, #tpu.memory_space<vmem>>, vector<1x256xf32>
    %c0_1 = arith.constant 0 : index
    %c0_2 = arith.constant 0 : index
    %1 = vector.load %arg5[%c0_1, %c0_2] : memref<1x256xf32, #tpu.memory_space<vmem>>, vector<1x256xf32>
    %c0_3 = arith.constant 0 : index
    %c0_4 = arith.constant 0 : index
    %2 = vector.load %arg7[%c0_3, %c0_4] : memref<1x256xf32, #tpu.memory_space<vmem>>, vector<1x256xf32>
    %c0_5 = arith.constant 0 : index
    %c0_6 = arith.constant 0 : index
    %3 = vector.load %arg9[%c0_5, %c0_6] : memref<1x256xf32, #tpu.memory_space<vmem>>, vector<1x256xf32>
    %c0_7 = arith.constant 0 : index
    %c0_8 = arith.constant 0 : index
    %4 = vector.load %arg11[%c0_7, %c0_8] : memref<1x128xf32, #tpu.memory_space<vmem>>, vector<1x128xf32>
    %c0_9 = arith.constant 0 : index
    %c0_10 = arith.constant 0 : index
    %5 = vector.load %arg1[%c0_9, %c0_10] : memref<8x32xf32, #tpu.memory_space<vmem>>, vector<8x32xf32>
    %6 = arith.truncf %5 : vector<8x32xf32> to vector<8x32xbf16>
    %c0_11 = arith.constant 0 : index
    %c0_12 = arith.constant 0 : index
    %7 = vector.load %arg2[%c0_11, %c0_12] : memref<32x256xbf16, #tpu.memory_space<vmem>>, vector<32x256xbf16>
    %cst = arith.constant dense<0.000000e+00> : vector<8x256xf32>
    %8 = tpu.matmul %6, %7, %cst {dimension_numbers = #tpu.dot_dimension_numbers<[1], [0], [0], [1], [0, 0, 1, 1], [], []>} : vector<8x32xbf16>, vector<32x256xbf16>, vector<8x256xf32> -> vector<8x256xf32>
    %9 = vector.broadcast %0 : vector<1x256xf32> to vector<8x256xf32>
    %10 = arith.addf %8, %9 : vector<8x256xf32>
    %cst_13 = arith.constant 0.000000e+00 : f32
    %11 = vector.broadcast %cst_13 : f32 to vector<8x256xf32>
    %12 = arith.maximumf %10, %11 : vector<8x256xf32>
    %13 = arith.truncf %12 : vector<8x256xf32> to vector<8x256xbf16>
    %c0_14 = arith.constant 0 : index
    %c0_15 = arith.constant 0 : index
    %14 = vector.load %arg4[%c0_14, %c0_15] : memref<256x256xbf16, #tpu.memory_space<vmem>>, vector<256x256xbf16>
    %cst_16 = arith.constant dense<0.000000e+00> : vector<8x256xf32>
    %15 = tpu.matmul %13, %14, %cst_16 {dimension_numbers = #tpu.dot_dimension_numbers<[1], [0], [0], [1], [0, 0, 1, 1], [], []>} : vector<8x256xbf16>, vector<256x256xbf16>, vector<8x256xf32> -> vector<8x256xf32>
    %16 = vector.broadcast %1 : vector<1x256xf32> to vector<8x256xf32>
    %17 = arith.addf %15, %16 : vector<8x256xf32>
    %cst_17 = arith.constant 0.000000e+00 : f32
    %18 = vector.broadcast %cst_17 : f32 to vector<8x256xf32>
    %19 = arith.maximumf %17, %18 : vector<8x256xf32>
    %20 = arith.truncf %19 : vector<8x256xf32> to vector<8x256xbf16>
    %c0_18 = arith.constant 0 : index
    %c0_19 = arith.constant 0 : index
    %21 = vector.load %arg6[%c0_18, %c0_19] : memref<256x256xbf16, #tpu.memory_space<vmem>>, vector<256x256xbf16>
    %cst_20 = arith.constant dense<0.000000e+00> : vector<8x256xf32>
    %22 = tpu.matmul %20, %21, %cst_20 {dimension_numbers = #tpu.dot_dimension_numbers<[1], [0], [0], [1], [0, 0, 1, 1], [], []>} : vector<8x256xbf16>, vector<256x256xbf16>, vector<8x256xf32> -> vector<8x256xf32>
    %23 = vector.broadcast %2 : vector<1x256xf32> to vector<8x256xf32>
    %24 = arith.addf %22, %23 : vector<8x256xf32>
    %cst_21 = arith.constant 0.000000e+00 : f32
    %25 = vector.broadcast %cst_21 : f32 to vector<8x256xf32>
    %26 = arith.maximumf %24, %25 : vector<8x256xf32>
    %27 = arith.truncf %26 : vector<8x256xf32> to vector<8x256xbf16>
    %c0_22 = arith.constant 0 : index
    %c0_23 = arith.constant 0 : index
    %28 = vector.load %arg8[%c0_22, %c0_23] : memref<256x256xbf16, #tpu.memory_space<vmem>>, vector<256x256xbf16>
    %cst_24 = arith.constant dense<0.000000e+00> : vector<8x256xf32>
    %29 = tpu.matmul %27, %28, %cst_24 {dimension_numbers = #tpu.dot_dimension_numbers<[1], [0], [0], [1], [0, 0, 1, 1], [], []>} : vector<8x256xbf16>, vector<256x256xbf16>, vector<8x256xf32> -> vector<8x256xf32>
    %30 = vector.broadcast %3 : vector<1x256xf32> to vector<8x256xf32>
    %31 = arith.addf %29, %30 : vector<8x256xf32>
    %cst_25 = arith.constant 0.000000e+00 : f32
    %32 = vector.broadcast %cst_25 : f32 to vector<8x256xf32>
    %33 = arith.maximumf %31, %32 : vector<8x256xf32>
    %34 = arith.truncf %33 : vector<8x256xf32> to vector<8x256xbf16>
    %c0_26 = arith.constant 0 : index
    %c0_27 = arith.constant 0 : index
    %35 = vector.load %arg10[%c0_26, %c0_27] : memref<256x128xbf16, #tpu.memory_space<vmem>>, vector<256x128xbf16>
    %cst_28 = arith.constant dense<0.000000e+00> : vector<8x128xf32>
    %36 = tpu.matmul %34, %35, %cst_28 {dimension_numbers = #tpu.dot_dimension_numbers<[1], [0], [0], [1], [0, 0, 1, 1], [], []>} : vector<8x256xbf16>, vector<256x128xbf16>, vector<8x128xf32> -> vector<8x128xf32>
    %37 = vector.broadcast %4 : vector<1x128xf32> to vector<8x128xf32>
    %38 = arith.addf %36, %37 : vector<8x128xf32>
    %c0_29 = arith.constant 0 : index
    %c0_30 = arith.constant 0 : index
    %39 = vector.load %arg12[%c0_29, %c0_30] : memref<8x128xf32, #tpu.memory_space<vmem>>, vector<8x128xf32>
    tpu.vector_store %arg12[%c0_29, %c0_30], %38 {strides = array<i32>} : memref<8x128xf32, #tpu.memory_space<vmem>>, vector<8x128xf32>,
    return
  }
  func.func @transform_0(%arg0: i32) -> (i32, i32) {
    %c0_i32 = arith.constant 0 : i32
    %c0_i32_0 = arith.constant 0 : i32
    return %arg0, %c0_i32 : i32, i32
  }
  func.func @transform_1(%arg0: i32) -> (i32, i32) {
    %c0_i32 = arith.constant 0 : i32
    %c0_i32_0 = arith.constant 0 : i32
    %c0_i32_1 = arith.constant 0 : i32
    return %c0_i32, %c0_i32_0 : i32, i32
  }
  func.func @transform_2(%arg0: i32) -> (i32, i32) {
    %c0_i32 = arith.constant 0 : i32
    %c0_i32_0 = arith.constant 0 : i32
    %c0_i32_1 = arith.constant 0 : i32
    return %c0_i32, %c0_i32_0 : i32, i32
  }
  func.func @transform_3(%arg0: i32) -> (i32, i32) {
    %c0_i32 = arith.constant 0 : i32
    %c0_i32_0 = arith.constant 0 : i32
    %c0_i32_1 = arith.constant 0 : i32
    return %c0_i32, %c0_i32_0 : i32, i32
  }
  func.func @transform_4(%arg0: i32) -> (i32, i32) {
    %c0_i32 = arith.constant 0 : i32
    %c0_i32_0 = arith.constant 0 : i32
    %c0_i32_1 = arith.constant 0 : i32
    return %c0_i32, %c0_i32_0 : i32, i32
  }
  func.func @transform_5(%arg0: i32) -> (i32, i32) {
    %c0_i32 = arith.constant 0 : i32
    %c0_i32_0 = arith.constant 0 : i32
    %c0_i32_1 = arith.constant 0 : i32
    return %c0_i32, %c0_i32_0 : i32, i32
  }
  func.func @transform_6(%arg0: i32) -> (i32, i32) {
    %c0_i32 = arith.constant 0 : i32
    %c0_i32_0 = arith.constant 0 : i32
    %c0_i32_1 = arith.constant 0 : i32
    return %c0_i32, %c0_i32_0 : i32, i32
  }
  func.func @transform_7(%arg0: i32) -> (i32, i32) {
    %c0_i32 = arith.constant 0 : i32
    %c0_i32_0 = arith.constant 0 : i32
    %c0_i32_1 = arith.constant 0 : i32
    return %c0_i32, %c0_i32_0 : i32, i32
  }
  func.func @transform_8(%arg0: i32) -> (i32, i32) {
    %c0_i32 = arith.constant 0 : i32
    %c0_i32_0 = arith.constant 0 : i32
    %c0_i32_1 = arith.constant 0 : i32
    return %c0_i32, %c0_i32_0 : i32, i32
  }
  func.func @transform_9(%arg0: i32) -> (i32, i32) {
    %c0_i32 = arith.constant 0 : i32
    %c0_i32_0 = arith.constant 0 : i32
    %c0_i32_1 = arith.constant 0 : i32
    return %c0_i32, %c0_i32_0 : i32, i32
  }
  func.func @transform_10(%arg0: i32) -> (i32, i32) {
    %c0_i32 = arith.constant 0 : i32
    %c0_i32_0 = arith.constant 0 : i32
    %c0_i32_1 = arith.constant 0 : i32
    return %c0_i32, %c0_i32_0 : i32, i32
  }
  func.func @transform_11(%arg0: i32) -> (i32, i32) {
    %c0_i32 = arith.constant 0 : i32
    %c0_i32_0 = arith.constant 0 : i32
    return %arg0, %c0_i32 : i32, i32
  }
}

</mosaic_0001>

<llo_original>
// kernel: qnetwork_forward.1
$region0: #{qnetwork_forward.1}
  #allocation0 [shape = 'u32[]', space=smem, size = 0x4, offset = 0x4, fixed_abs, tag = 'smem constant byte address 0x4 - core index']
  #allocation1 [shape = 'u32[144,128]{1,0:T(1,128)}', space=vmem, size = 0x12000, scoped, tag = 'internal scratch']
  %s0 = inlined_call_operand.vmem [shape: f32[8,32], index: 0, kind: input, shape index: {}]
  %s1 = inlined_call_operand.vmem [shape: bf16[32,256], index: 1, kind: input, shape index: {}]
  %s2 = inlined_call_operand.vmem [shape: f32[1,256], index: 2, kind: input, shape index: {}]
  %s3 = inlined_call_operand.vmem [shape: bf16[256,256], index: 3, kind: input, shape index: {}]
  %s4 = inlined_call_operand.vmem [shape: f32[1,256], index: 4, kind: input, shape index: {}]
  %s5 = inlined_call_operand.hbm [shape: bf16[256,256], index: 5, kind: input, shape index: {}]
  %s6 = inlined_call_operand.vmem [shape: f32[1,256], index: 6, kind: input, shape index: {}]
  %s7 = inlined_call_operand.hbm [shape: bf16[256,256], index: 7, kind: input, shape index: {}]
  %s8 = inlined_call_operand.vmem [shape: f32[1,256], index: 8, kind: input, shape index: {}]
  %s9 = inlined_call_operand.vmem [shape: bf16[256,128], index: 9, kind: input, shape index: {}]
  %s10 = inlined_call_operand.vmem [shape: f32[1,128], index: 10, kind: input, shape index: {}]
  %s11 = inlined_call_operand.hbm [shape: f32[8,128], index: 11, kind: output, shape index: {}]
  %s12 = sld [smem:[#allocation0]]
  $region62: #{qnetwork_forward.1} parent=0
    _
  %s14 = ssub.s32 1, %s12
  %s15 = scalar_select 0, %s14, %s12
  $region1: #{qnetwork_forward.1} parent=0
    #allocation2 [shape = 'u8[131072]{0}', space=vmem, size = 0x20000, scoped, tag = 'input window, operand 5, single buffered']
    #allocation3 [shape = 's32[1]{0}', space=sflag, size = 0x4, scoped, tag = 'scoped memory for qnetwork_forward.1']
    #allocation4 [shape = 's32[1]{0}', space=sflag, size = 0x4, scoped, tag = 'scoped memory for qnetwork_forward.1']
    #allocation5 [shape = 'u8[131072]{0}', space=vmem, size = 0x20000, scoped, tag = 'input window, operand 7, single buffered']
    #allocation6 [shape = 's32[1]{0}', space=sflag, size = 0x4, scoped, tag = 'scoped memory for qnetwork_forward.1']
    #allocation7 [shape = 'u8[4096]{0}', space=vmem, size = 0x1000, scoped, tag = 'output window, operand 0, single buffered']
    %16 = vsyncpa [#allocation3], 0
    %17 = vsyncpa [#allocation6], 0
    %18 = vsyncpa [#allocation4], 0
    // Predicated region
    $region2: #{qnetwork_forward.1} parent=1 // pred_check
      _
    $region3: #{qnetwork_forward.1} parent=1 // pred_check_branch
      %20 = sbr.rel (0) target = $region5
    $region4: #{qnetwork_forward.1} parent=1 // pred_region
      _
    $region5: #{qnetwork_forward.1} parent=1 // pred_fallthru
      _
    // Predicated region
    $region6: #{qnetwork_forward.1} parent=1 // pred_check
      _
    $region7: #{qnetwork_forward.1} parent=1 // pred_check_branch
      %22 = sbr.rel (0) target = $region9
    $region8: #{qnetwork_forward.1} parent=1 // pred_region
      _
    $region9: #{qnetwork_forward.1} parent=1 // pred_fallthru
      _
    // Predicated region
    $region10: #{qnetwork_forward.1} parent=1 // pred_check
      _
    $region11: #{qnetwork_forward.1} parent=1 // pred_check_branch
      %24 = sbr.rel (0) target = $region13
    $region12: #{qnetwork_forward.1} parent=1 // pred_region
      _
    $region13: #{qnetwork_forward.1} parent=1 // pred_fallthru
      _
    // Predicated region
    $region14: #{qnetwork_forward.1} parent=1 // pred_check
      _
    $region15: #{qnetwork_forward.1} parent=1 // pred_check_branch
      %26 = sbr.rel (0) target = $region17
    $region16: #{qnetwork_forward.1} parent=1 // pred_region
      _
    $region17: #{qnetwork_forward.1} parent=1 // pred_fallthru
      _
    // Predicated region
    $region18: #{qnetwork_forward.1} parent=1 // pred_check
      _
    $region19: #{qnetwork_forward.1} parent=1 // pred_check_branch
      %28 = sbr.rel (0) target = $region21
    $region20: #{qnetwork_forward.1} parent=1 // pred_region
      _
    $region21: #{qnetwork_forward.1} parent=1 // pred_fallthru
      _
    // Predicated region
    $region22: #{qnetwork_forward.1} parent=1 // pred_check
      _
    $region23: #{qnetwork_forward.1} parent=1 // pred_check_branch
      %30 = sbr.rel (0) target = $region25
    $region24: #{qnetwork_forward.1} parent=1 // pred_region
      %s32 = ssub.s32 4096, 4096
      %33 = vsyncadd [#allocation3], %s32
      %s34 = sshll.u32 [#allocation2], 4
      %s35 = int_to_ptr.vmem [resolvable:$true] %s34
      %40 = dma.hbm_to_vmem [thread:$0]  %s5, 4096, %s35, [#allocation3], 128, 128, 8
    $region25: #{qnetwork_forward.1} parent=1 // pred_fallthru
      _
    // Predicated region
    $region26: #{qnetwork_forward.1} parent=1 // pred_check
      _
    $region27: #{qnetwork_forward.1} parent=1 // pred_check_branch
      %42 = sbr.rel (0) target = $region29
    $region28: #{qnetwork_forward.1} parent=1 // pred_region
      _
    $region29: #{qnetwork_forward.1} parent=1 // pred_fallthru
      _
    // Predicated region
    $region30: #{qnetwork_forward.1} parent=1 // pred_check
      _
    $region31: #{qnetwork_forward.1} parent=1 // pred_check_branch
      %44 = sbr.rel (0) target = $region33
    $region32: #{qnetwork_forward.1} parent=1 // pred_region
      %s46 = ssub.s32 4096, 4096
      %47 = vsyncadd [#allocation6], %s46
      %s48 = sshll.u32 [#allocation5], 4
      %s49 = int_to_ptr.vmem [resolvable:$true] %s48
      %54 = dma.hbm_to_vmem [thread:$0]  %s7, 4096, %s49, [#allocation6], 128, 128, 8
    $region33: #{qnetwork_forward.1} parent=1 // pred_fallthru
      _
    // Predicated region
    $region34: #{qnetwork_forward.1} parent=1 // pred_check
      _
    $region35: #{qnetwork_forward.1} parent=1 // pred_check_branch
      %56 = sbr.rel (0) target = $region37
    $region36: #{qnetwork_forward.1} parent=1 // pred_region
      _
    $region37: #{qnetwork_forward.1} parent=1 // pred_fallthru
      _
    // Predicated region
    $region38: #{qnetwork_forward.1} parent=1 // pred_check
      _
    $region39: #{qnetwork_forward.1} parent=1 // pred_check_branch
      %58 = sbr.rel (0) target = $region41
    $region40: #{qnetwork_forward.1} parent=1 // pred_region
      _
    $region41: #{qnetwork_forward.1} parent=1 // pred_fallthru
      _
    // Predicated region
    $region42: #{qnetwork_forward.1} parent=1 // pred_check
      _
    $region43: #{qnetwork_forward.1} parent=1 // pred_check_branch
      %60 = sbr.rel (0) target = $region45
    $region44: #{qnetwork_forward.1} parent=1 // pred_region
      _
    $region45: #{qnetwork_forward.1} parent=1 // pred_fallthru
      _
    // Predicated region
    $region46: #{qnetwork_forward.1} parent=1 // pred_check
      _
    $region47: #{qnetwork_forward.1} parent=1 // pred_check_branch
      %62 = sbr.rel (0) target = $region49
    $region48: #{qnetwork_forward.1} parent=1 // pred_region
      %63 = dma.done [#allocation3], 4096
    $region49: #{qnetwork_forward.1} parent=1 // pred_fallthru
      _
    // Predicated region
    $region50: #{qnetwork_forward.1} parent=1 // pred_check
      _
    $region51: #{qnetwork_forward.1} parent=1 // pred_check_branch
      %65 = sbr.rel (0) target = $region53
    $region52: #{qnetwork_forward.1} parent=1 // pred_region
      %66 = dma.done [#allocation6], 4096
    $region53: #{qnetwork_forward.1} parent=1 // pred_fallthru
      _
    %v68 = vld [vmem:[%s2] sm:$0x3]
    %v69 = vld [vmem:[%s4] sm:$0x3]
    %v70 = vld [vmem:[%s6] sm:$0x3]
    %v71 = vld [vmem:[%s8] sm:$0x3]
    %v72 = vld [vmem:[%s10] sm:$0x1]
    %v73 = vld [vmem:[%s0] sm:$0xff]
    %v74 = vpack.c.bf16 %v73, %v73
    %v75 = vld [vmem:[%s1] sm:$0xff]
    %v76 = vld [vmem:[%s1 + $0x8] sm:$0xff]
    %v77 = vld [vmem:[%s1 + $0x10] sm:$0xff]
    %v78 = vld [vmem:[%s1 + $0x18] sm:$0xff]
    %v80 = vlaneseq
    %v81 = vshrl.u32 %v80, 7
    %v82 = vsub.s32 0, %v81
    %v83 = vrot.slane %v68, %v82
    %v84 = vlaneseq
    %v85 = vshrl.u32 %v84, 7
    %v86 = vsub.s32 1, %v85
    %v87 = vrot.slane %v68, %v86
    %v94 = vunpack.c.l.b16 %v75
    %v95 = vunpack.c.h.b16 %v75
    %v96 = vunpack.c.l.b16 %v76
    %v97 = vunpack.c.h.b16 %v76
    %v98 = vunpack.c.l.b16 %v77
    %v99 = vunpack.c.h.b16 %v77
    %v100 = vunpack.c.l.b16 %v78
    %v101 = vunpack.c.h.b16 %v78
    %v102 = vpack.c.b16 %v96, %v94
    %v103 = vpack.c.b16 %v97, %v95
    %v104 = vpack.c.b16 %v100, %v98
    %v105 = vpack.c.b16 %v101, %v99
    %vm110 = vcmask 261120
    %v112 = vsel %vm110, %v74, 0
    %114 = vmatprep.subr.bf16.mxu0 %v103
    %115 = vmatpush1.bf16.msra.mxu0 %v102
    %116 = vmatprep.subr.bf16.mxu0 %v105
    %117 = vmatpush1.bf16.msra.mxu0 %v104
    %118 = vmatprep.subr.bf16.mxu0 0
    %119 = vmatpush1.bf16.msra.mxu0 0
    %120 = vmatprep.subr.bf16.mxu0 0
    %121 = vmatpush1.bf16.msra.mxu0 0
    %122 = vmatprep.subr.bf16.mxu0 0
    %123 = vmatpush1.bf16.msra.mxu0 0
    %124 = vmatprep.subr.bf16.mxu0 0
    %125 = vmatpush1.bf16.msra.mxu0 0
    %126 = vmatprep.subr.bf16.mxu0 0
    %127 = vmatpush1.bf16.msra.mxu0 0
    %128 = vmatprep.subr.bf16.mxu0 0
    %129 = vmatpush1.bf16.msra.mxu0 0
    %130 = vmatprep.subr.bf16.mxu0 0
    %131 = vmatpush1.bf16.msra.mxu0 0
    %132 = vmatprep.subr.bf16.mxu0 0
    %133 = vmatpush1.bf16.msra.mxu0 0
    %134 = vmatprep.subr.bf16.mxu0 0
    %135 = vmatpush1.bf16.msra.mxu0 0
    %136 = vmatprep.subr.bf16.mxu0 0
    %137 = vmatpush1.bf16.msra.mxu0 0
    %138 = vmatprep.subr.bf16.mxu0 0
    %139 = vmatpush1.bf16.msra.mxu0 0
    %140 = vmatprep.subr.bf16.mxu0 0
    %141 = vmatpush1.bf16.msra.mxu0 0
    %142 = vmatprep.subr.bf16.mxu0 0
    %143 = vmatpush1.bf16.msra.mxu0 0
    %144 = vmatprep.subr.bf16.mxu0 0
    %145 = vmatpush1.bf16.msra.mxu0 0
    %146 = vmatprep.mubr.bf16.mxu0 0
    %147 = vmatmul.mubr.bf16.gmra.mrb[0].mxu0 %v112
    %v148 = vpop.f32.mrb[0].mxu0
    %v149 = vadd.f32 %v83, %v148
    %v150 = vpop.f32.mrb[0].mxu0
    %v151 = vadd.f32 %v87, %v150
    %v152 = vpop.f32.mrb[0].mxu0
    %v153 = vpop.f32.mrb[0].mxu0
    %154 = vdwg.mxu0
    %v155 = vmax.f32 %v149, 0.0
    %v156 = vmax.f32 %v151, 0.0
    %v157 = vpack.c.bf16 %v155, %v155
    %v158 = vpack.c.bf16 %v156, %v156
    %v159 = vld [vmem:[%s3] sm:$0xff]
    %v160 = vld [vmem:[%s3 + $0x8] sm:$0xff]
    %v161 = vld [vmem:[%s3 + $0x10] sm:$0xff]
    %v162 = vld [vmem:[%s3 + $0x18] sm:$0xff]
    %v163 = vld [vmem:[%s3 + $0x20] sm:$0xff]
    %v164 = vld [vmem:[%s3 + $0x28] sm:$0xff]
    %v165 = vld [vmem:[%s3 + $0x30] sm:$0xff]
    %v166 = vld [vmem:[%s3 + $0x38] sm:$0xff]
    %v167 = vld [vmem:[%s3 + $0x40] sm:$0xff]
    %v168 = vld [vmem:[%s3 + $0x48] sm:$0xff]
    %v169 = vld [vmem:[%s3 + $0x50] sm:$0xff]
    %v170 = vld [vmem:[%s3 + $0x58] sm:$0xff]
    %v171 = vld [vmem:[%s3 + $0x60] sm:$0xff]
    %v172 = vld [vmem:[%s3 + $0x68] sm:$0xff]
    %v173 = vld [vmem:[%s3 + $0x70] sm:$0xff]
    %v174 = vld [vmem:[%s3 + $0x78] sm:$0xff]
    %v175 = vld [vmem:[%s3 + $0x80] sm:$0xff]
    %v176 = vld [vmem:[%s3 + $0x88] sm:$0xff]
    %v177 = vld [vmem:[%s3 + $0x90] sm:$0xff]
    %v178 = vld [vmem:[%s3 + $0x98] sm:$0xff]
    %v179 = vld [vmem:[%s3 + $0xa0] sm:$0xff]
    %v180 = vld [vmem:[%s3 + $0xa8] sm:$0xff]
    %v181 = vld [vmem:[%s3 + $0xb0] sm:$0xff]
    %v182 = vld [vmem:[%s3 + $0xb8] sm:$0xff]
    %v183 = vld [vmem:[%s3 + $0xc0] sm:$0xff]
    %v184 = vld [vmem:[%s3 + $0xc8] sm:$0xff]
    %v185 = vld [vmem:[%s3 + $0xd0] sm:$0xff]
    %v186 = vld [vmem:[%s3 + $0xd8] sm:$0xff]
    %v187 = vld [vmem:[%s3 + $0xe0] sm:$0xff]
    %v188 = vld [vmem:[%s3 + $0xe8] sm:$0xff]
    %v189 = vld [vmem:[%s3 + $0xf0] sm:$0xff]
    %v190 = vld [vmem:[%s3 + $0xf8] sm:$0xff]
    %v192 = vlaneseq
    %v193 = vshrl.u32 %v192, 7
    %v194 = vsub.s32 0, %v193
    %v195 = vrot.slane %v69, %v194
    %v196 = vlaneseq
    %v197 = vshrl.u32 %v196, 7
    %v198 = vsub.s32 1, %v197
    %v199 = vrot.slane %v69, %v198
    %v234 = vunpack.c.l.b16 %v159
    %v235 = vunpack.c.h.b16 %v159
    %v236 = vunpack.c.l.b16 %v160
    %v237 = vunpack.c.h.b16 %v160
    %v238 = vunpack.c.l.b16 %v161
    %v239 = vunpack.c.h.b16 %v161
    %v240 = vunpack.c.l.b16 %v162
    %v241 = vunpack.c.h.b16 %v162
    %v242 = vunpack.c.l.b16 %v163
    %v243 = vunpack.c.h.b16 %v163
    %v244 = vunpack.c.l.b16 %v164
    %v245 = vunpack.c.h.b16 %v164
    %v246 = vunpack.c.l.b16 %v165
    %v247 = vunpack.c.h.b16 %v165
    %v248 = vunpack.c.l.b16 %v166
    %v249 = vunpack.c.h.b16 %v166
    %v250 = vunpack.c.l.b16 %v167
    %v251 = vunpack.c.h.b16 %v167
    %v252 = vunpack.c.l.b16 %v168
    %v253 = vunpack.c.h.b16 %v168
    %v254 = vunpack.c.l.b16 %v169
    %v255 = vunpack.c.h.b16 %v169
    %v256 = vunpack.c.l.b16 %v170
    %v257 = vunpack.c.h.b16 %v170
    %v258 = vunpack.c.l.b16 %v171
    %v259 = vunpack.c.h.b16 %v171
    %v260 = vunpack.c.l.b16 %v172
    %v261 = vunpack.c.h.b16 %v172
    %v262 = vunpack.c.l.b16 %v173
    %v263 = vunpack.c.h.b16 %v173
    %v264 = vunpack.c.l.b16 %v174
    %v265 = vunpack.c.h.b16 %v174
    %v266 = vunpack.c.l.b16 %v175
    %v267 = vunpack.c.h.b16 %v175
    %v268 = vunpack.c.l.b16 %v176
    %v269 = vunpack.c.h.b16 %v176
    %v270 = vunpack.c.l.b16 %v177
    %v271 = vunpack.c.h.b16 %v177
    %v272 = vunpack.c.l.b16 %v178
    %v273 = vunpack.c.h.b16 %v178
    %v274 = vunpack.c.l.b16 %v179
    %v275 = vunpack.c.h.b16 %v179
    %v276 = vunpack.c.l.b16 %v180
    %v277 = vunpack.c.h.b16 %v180
    %v278 = vunpack.c.l.b16 %v181
    %v279 = vunpack.c.h.b16 %v181
    %v280 = vunpack.c.l.b16 %v182
    %v281 = vunpack.c.h.b16 %v182
    %v282 = vunpack.c.l.b16 %v183
    %v283 = vunpack.c.h.b16 %v183
    %v284 = vunpack.c.l.b16 %v184
    %v285 = vunpack.c.h.b16 %v184
    %v286 = vunpack.c.l.b16 %v185
    %v287 = vunpack.c.h.b16 %v185
    %v288 = vunpack.c.l.b16 %v186
    %v289 = vunpack.c.h.b16 %v186
    %v290 = vunpack.c.l.b16 %v187
    %v291 = vunpack.c.h.b16 %v187
    %v292 = vunpack.c.l.b16 %v188
    %v293 = vunpack.c.h.b16 %v188
    %v294 = vunpack.c.l.b16 %v189
    %v295 = vunpack.c.h.b16 %v189
    %v296 = vunpack.c.l.b16 %v190
    %v297 = vunpack.c.h.b16 %v190
    %v298 = vpack.c.b16 %v236, %v234
    %v299 = vpack.c.b16 %v237, %v235
    %v300 = vpack.c.b16 %v240, %v238
    %v301 = vpack.c.b16 %v241, %v239
    %v302 = vpack.c.b16 %v244, %v242
    %v303 = vpack.c.b16 %v245, %v243
    %v304 = vpack.c.b16 %v248, %v246
    %v305 = vpack.c.b16 %v249, %v247
    %v306 = vpack.c.b16 %v252, %v250
    %v307 = vpack.c.b16 %v253, %v251
    %v308 = vpack.c.b16 %v256, %v254
    %v309 = vpack.c.b16 %v257, %v255
    %v310 = vpack.c.b16 %v260, %v258
    %v311 = vpack.c.b16 %v261, %v259
    %v312 = vpack.c.b16 %v264, %v262
    %v313 = vpack.c.b16 %v265, %v263
    %v314 = vpack.c.b16 %v268, %v266
    %v315 = vpack.c.b16 %v269, %v267
    %v316 = vpack.c.b16 %v272, %v270
    %v317 = vpack.c.b16 %v273, %v271
    %v318 = vpack.c.b16 %v276, %v274
    %v319 = vpack.c.b16 %v277, %v275
    %v320 = vpack.c.b16 %v280, %v278
    %v321 = vpack.c.b16 %v281, %v279
    %v322 = vpack.c.b16 %v284, %v282
    %v323 = vpack.c.b16 %v285, %v283
    %v324 = vpack.c.b16 %v288, %v286
    %v325 = vpack.c.b16 %v289, %v287
    %v326 = vpack.c.b16 %v292, %v290
    %v327 = vpack.c.b16 %v293, %v291
    %v328 = vpack.c.b16 %v296, %v294
    %v329 = vpack.c.b16 %v297, %v295
    %362 = vmatprep.subr.bf16.mxu0 %v299
    %363 = vmatpush1.bf16.msra.mxu0 %v298
    %364 = vmatprep.subr.bf16.mxu0 %v301
    %365 = vmatpush1.bf16.msra.mxu0 %v300
    %366 = vmatprep.subr.bf16.mxu0 %v303
    %367 = vmatpush1.bf16.msra.mxu0 %v302
    %368 = vmatprep.subr.bf16.mxu0 %v305
    %369 = vmatpush1.bf16.msra.mxu0 %v304
    %370 = vmatprep.subr.bf16.mxu0 %v307
    %371 = vmatpush1.bf16.msra.mxu0 %v306
    %372 = vmatprep.subr.bf16.mxu0 %v309
    %373 = vmatpush1.bf16.msra.mxu0 %v308
    %374 = vmatprep.subr.bf16.mxu0 %v311
    %375 = vmatpush1.bf16.msra.mxu0 %v310
    %376 = vmatprep.subr.bf16.mxu0 %v313
    %377 = vmatpush1.bf16.msra.mxu0 %v312
    %378 = vmatprep.subr.bf16.mxu0 %v315
    %379 = vmatpush1.bf16.msra.mxu0 %v314
    %380 = vmatprep.subr.bf16.mxu0 %v317
    %381 = vmatpush1.bf16.msra.mxu0 %v316
    %382 = vmatprep.subr.bf16.mxu0 %v319
    %383 = vmatpush1.bf16.msra.mxu0 %v318
    %384 = vmatprep.subr.bf16.mxu0 %v321
    %385 = vmatpush1.bf16.msra.mxu0 %v320
    %386 = vmatprep.subr.bf16.mxu0 %v323
    %387 = vmatpush1.bf16.msra.mxu0 %v322
    %388 = vmatprep.subr.bf16.mxu0 %v325
    %389 = vmatpush1.bf16.msra.mxu0 %v324
    %390 = vmatprep.subr.bf16.mxu0 %v327
    %391 = vmatpush1.bf16.msra.mxu0 %v326
    %392 = vmatprep.subr.bf16.mxu0 %v329
    %393 = vmatpush1.bf16.msra.mxu0 %v328
    %394 = vmatprep.mubr.bf16.mxu0 %v158
    %395 = vmatmul.mubr.bf16.gmra.mrb[0].mxu0 %v157
    %v396 = vpop.f32.mrb[0].mxu0
    %v397 = vadd.f32 %v195, %v396
    %v398 = vpop.f32.mrb[0].mxu0
    %v399 = vadd.f32 %v199, %v398
    %v400 = vpop.f32.mrb[0].mxu0
    %v401 = vpop.f32.mrb[0].mxu0
    %402 = vdwg.mxu0
    %v403 = vmax.f32 %v397, 0.0
    %v404 = vmax.f32 %v399, 0.0
    %v405 = vpack.c.bf16 %v403, %v403
    %v406 = vpack.c.bf16 %v404, %v404
    %v407 = vld [vmem:[#allocation2] sm:$0xff]
    %v408 = vld [vmem:[#allocation2 + $0x8] sm:$0xff]
    %v409 = vld [vmem:[#allocation2 + $0x10] sm:$0xff]
    %v410 = vld [vmem:[#allocation2 + $0x18] sm:$0xff]
    %v411 = vld [vmem:[#allocation2 + $0x20] sm:$0xff]
    %v412 = vld [vmem:[#allocation2 + $0x28] sm:$0xff]
    %v413 = vld [vmem:[#allocation2 + $0x30] sm:$0xff]
    %v414 = vld [vmem:[#allocation2 + $0x38] sm:$0xff]
    %v415 = vld [vmem:[#allocation2 + $0x40] sm:$0xff]
    %v416 = vld [vmem:[#allocation2 + $0x48] sm:$0xff]
    %v417 = vld [vmem:[#allocation2 + $0x50] sm:$0xff]
    %v418 = vld [vmem:[#allocation2 + $0x58] sm:$0xff]
    %v419 = vld [vmem:[#allocation2 + $0x60] sm:$0xff]
    %v420 = vld [vmem:[#allocation2 + $0x68] sm:$0xff]
    %v421 = vld [vmem:[#allocation2 + $0x70] sm:$0xff]
    %v422 = vld [vmem:[#allocation2 + $0x78] sm:$0xff]
    %v423 = vld [vmem:[#allocation2 + $0x80] sm:$0xff]
    %v424 = vld [vmem:[#allocation2 + $0x88] sm:$0xff]
    %v425 = vld [vmem:[#allocation2 + $0x90] sm:$0xff]
    %v426 = vld [vmem:[#allocation2 + $0x98] sm:$0xff]
    %v427 = vld [vmem:[#allocation2 + $0xa0] sm:$0xff]
    %v428 = vld [vmem:[#allocation2 + $0xa8] sm:$0xff]
    %v429 = vld [vmem:[#allocation2 + $0xb0] sm:$0xff]
    %v430 = vld [vmem:[#allocation2 + $0xb8] sm:$0xff]
    %v431 = vld [vmem:[#allocation2 + $0xc0] sm:$0xff]
    %v432 = vld [vmem:[#allocation2 + $0xc8] sm:$0xff]
    %v433 = vld [vmem:[#allocation2 + $0xd0] sm:$0xff]
    %v434 = vld [vmem:[#allocation2 + $0xd8] sm:$0xff]
    %v435 = vld [vmem:[#allocation2 + $0xe0] sm:$0xff]
    %v436 = vld [vmem:[#allocation2 + $0xe8] sm:$0xff]
    %v437 = vld [vmem:[#allocation2 + $0xf0] sm:$0xff]
    %v438 = vld [vmem:[#allocation2 + $0xf8] sm:$0xff]
    %v440 = vlaneseq
    %v441 = vshrl.u32 %v440, 7
    %v442 = vsub.s32 0, %v441
    %v443 = vrot.slane %v70, %v442
    %v444 = vlaneseq
    %v445 = vshrl.u32 %v444, 7
    %v446 = vsub.s32 1, %v445
    %v447 = vrot.slane %v70, %v446
    %v482 = vunpack.c.l.b16 %v407
    %v483 = vunpack.c.h.b16 %v407
    %v484 = vunpack.c.l.b16 %v408
    %v485 = vunpack.c.h.b16 %v408
    %v486 = vunpack.c.l.b16 %v409
    %v487 = vunpack.c.h.b16 %v409
    %v488 = vunpack.c.l.b16 %v410
    %v489 = vunpack.c.h.b16 %v410
    %v490 = vunpack.c.l.b16 %v411
    %v491 = vunpack.c.h.b16 %v411
    %v492 = vunpack.c.l.b16 %v412
    %v493 = vunpack.c.h.b16 %v412
    %v494 = vunpack.c.l.b16 %v413
    %v495 = vunpack.c.h.b16 %v413
    %v496 = vunpack.c.l.b16 %v414
    %v497 = vunpack.c.h.b16 %v414
    %v498 = vunpack.c.l.b16 %v415
    %v499 = vunpack.c.h.b16 %v415
    %v500 = vunpack.c.l.b16 %v416
    %v501 = vunpack.c.h.b16 %v416
    %v502 = vunpack.c.l.b16 %v417
    %v503 = vunpack.c.h.b16 %v417
    %v504 = vunpack.c.l.b16 %v418
    %v505 = vunpack.c.h.b16 %v418
    %v506 = vunpack.c.l.b16 %v419
    %v507 = vunpack.c.h.b16 %v419
    %v508 = vunpack.c.l.b16 %v420
    %v509 = vunpack.c.h.b16 %v420
    %v510 = vunpack.c.l.b16 %v421
    %v511 = vunpack.c.h.b16 %v421
    %v512 = vunpack.c.l.b16 %v422
    %v513 = vunpack.c.h.b16 %v422
    %v514 = vunpack.c.l.b16 %v423
    %v515 = vunpack.c.h.b16 %v423
    %v516 = vunpack.c.l.b16 %v424
    %v517 = vunpack.c.h.b16 %v424
    %v518 = vunpack.c.l.b16 %v425
    %v519 = vunpack.c.h.b16 %v425
    %v520 = vunpack.c.l.b16 %v426
    %v521 = vunpack.c.h.b16 %v426
    %v522 = vunpack.c.l.b16 %v427
    %v523 = vunpack.c.h.b16 %v427
    %v524 = vunpack.c.l.b16 %v428
    %v525 = vunpack.c.h.b16 %v428
    %v526 = vunpack.c.l.b16 %v429
    %v527 = vunpack.c.h.b16 %v429
    %v528 = vunpack.c.l.b16 %v430
    %v529 = vunpack.c.h.b16 %v430
    %v530 = vunpack.c.l.b16 %v431
    %v531 = vunpack.c.h.b16 %v431
    %v532 = vunpack.c.l.b16 %v432
    %v533 = vunpack.c.h.b16 %v432
    %v534 = vunpack.c.l.b16 %v433
    %v535 = vunpack.c.h.b16 %v433
    %v536 = vunpack.c.l.b16 %v434
    %v537 = vunpack.c.h.b16 %v434
    %v538 = vunpack.c.l.b16 %v435
    %v539 = vunpack.c.h.b16 %v435
    %v540 = vunpack.c.l.b16 %v436
    %v541 = vunpack.c.h.b16 %v436
    %v542 = vunpack.c.l.b16 %v437
    %v543 = vunpack.c.h.b16 %v437
    %v544 = vunpack.c.l.b16 %v438
    %v545 = vunpack.c.h.b16 %v438
    %v546 = vpack.c.b16 %v484, %v482
    %v547 = vpack.c.b16 %v485, %v483
    %v548 = vpack.c.b16 %v488, %v486
    %v549 = vpack.c.b16 %v489, %v487
    %v550 = vpack.c.b16 %v492, %v490
    %v551 = vpack.c.b16 %v493, %v491
    %v552 = vpack.c.b16 %v496, %v494
    %v553 = vpack.c.b16 %v497, %v495
    %v554 = vpack.c.b16 %v500, %v498
    %v555 = vpack.c.b16 %v501, %v499
    %v556 = vpack.c.b16 %v504, %v502
    %v557 = vpack.c.b16 %v505, %v503
    %v558 = vpack.c.b16 %v508, %v506
    %v559 = vpack.c.b16 %v509, %v507
    %v560 = vpack.c.b16 %v512, %v510
    %v561 = vpack.c.b16 %v513, %v511
    %v562 = vpack.c.b16 %v516, %v514
    %v563 = vpack.c.b16 %v517, %v515
    %v564 = vpack.c.b16 %v520, %v518
    %v565 = vpack.c.b16 %v521, %v519
    %v566 = vpack.c.b16 %v524, %v522
    %v567 = vpack.c.b16 %v525, %v523
    %v568 = vpack.c.b16 %v528, %v526
    %v569 = vpack.c.b16 %v529, %v527
    %v570 = vpack.c.b16 %v532, %v530
    %v571 = vpack.c.b16 %v533, %v531
    %v572 = vpack.c.b16 %v536, %v534
    %v573 = vpack.c.b16 %v537, %v535
    %v574 = vpack.c.b16 %v540, %v538
    %v575 = vpack.c.b16 %v541, %v539
    %v576 = vpack.c.b16 %v544, %v542
    %v577 = vpack.c.b16 %v545, %v543
    %610 = vmatprep.subr.bf16.mxu0 %v547
    %611 = vmatpush1.bf16.msra.mxu0 %v546
    %612 = vmatprep.subr.bf16.mxu0 %v549
    %613 = vmatpush1.bf16.msra.mxu0 %v548
    %614 = vmatprep.subr.bf16.mxu0 %v551
    %615 = vmatpush1.bf16.msra.mxu0 %v550
    %616 = vmatprep.subr.bf16.mxu0 %v553
    %617 = vmatpush1.bf16.msra.mxu0 %v552
    %618 = vmatprep.subr.bf16.mxu0 %v555
    %619 = vmatpush1.bf16.msra.mxu0 %v554
    %620 = vmatprep.subr.bf16.mxu0 %v557
    %621 = vmatpush1.bf16.msra.mxu0 %v556
    %622 = vmatprep.subr.bf16.mxu0 %v559
    %623 = vmatpush1.bf16.msra.mxu0 %v558
    %624 = vmatprep.subr.bf16.mxu0 %v561
    %625 = vmatpush1.bf16.msra.mxu0 %v560
    %626 = vmatprep.subr.bf16.mxu0 %v563
    %627 = vmatpush1.bf16.msra.mxu0 %v562
    %628 = vmatprep.subr.bf16.mxu0 %v565
    %629 = vmatpush1.bf16.msra.mxu0 %v564
    %630 = vmatprep.subr.bf16.mxu0 %v567
    %631 = vmatpush1.bf16.msra.mxu0 %v566
    %632 = vmatprep.subr.bf16.mxu0 %v569
    %633 = vmatpush1.bf16.msra.mxu0 %v568
    %634 = vmatprep.subr.bf16.mxu0 %v571
    %635 = vmatpush1.bf16.msra.mxu0 %v570
    %636 = vmatprep.subr.bf16.mxu0 %v573
    %637 = vmatpush1.bf16.msra.mxu0 %v572
    %638 = vmatprep.subr.bf16.mxu0 %v575
    %639 = vmatpush1.bf16.msra.mxu0 %v574
    %640 = vmatprep.subr.bf16.mxu0 %v577
    %641 = vmatpush1.bf16.msra.mxu0 %v576
    %642 = vmatprep.mubr.bf16.mxu0 %v406
    %643 = vmatmul.mubr.bf16.gmra.mrb[0].mxu0 %v405
    %v644 = vpop.f32.mrb[0].mxu0
    %v645 = vadd.f32 %v443, %v644
    %v646 = vpop.f32.mrb[0].mxu0
    %v647 = vadd.f32 %v447, %v646
    %v648 = vpop.f32.mrb[0].mxu0
    %v649 = vpop.f32.mrb[0].mxu0
    %650 = vdwg.mxu0
    %v651 = vmax.f32 %v645, 0.0
    %v652 = vmax.f32 %v647, 0.0
    %v653 = vpack.c.bf16 %v651, %v651
    %v654 = vpack.c.bf16 %v652, %v652
    %v655 = vld [vmem:[#allocation5] sm:$0xff]
    %v656 = vld [vmem:[#allocation5 + $0x8] sm:$0xff]
    %v657 = vld [vmem:[#allocation5 + $0x10] sm:$0xff]
    %v658 = vld [vmem:[#allocation5 + $0x18] sm:$0xff]
    %v659 = vld [vmem:[#allocation5 + $0x20] sm:$0xff]
    %v660 = vld [vmem:[#allocation5 + $0x28] sm:$0xff]
    %v661 = vld [vmem:[#allocation5 + $0x30] sm:$0xff]
    %v662 = vld [vmem:[#allocation5 + $0x38] sm:$0xff]
    %v663 = vld [vmem:[#allocation5 + $0x40] sm:$0xff]
    %v664 = vld [vmem:[#allocation5 + $0x48] sm:$0xff]
    %v665 = vld [vmem:[#allocation5 + $0x50] sm:$0xff]
    %v666 = vld [vmem:[#allocation5 + $0x58] sm:$0xff]
    %v667 = vld [vmem:[#allocation5 + $0x60] sm:$0xff]
    %v668 = vld [vmem:[#allocation5 + $0x68] sm:$0xff]
    %v669 = vld [vmem:[#allocation5 + $0x70] sm:$0xff]
    %v670 = vld [vmem:[#allocation5 + $0x78] sm:$0xff]
    %v671 = vld [vmem:[#allocation5 + $0x80] sm:$0xff]
    %v672 = vld [vmem:[#allocation5 + $0x88] sm:$0xff]
    %v673 = vld [vmem:[#allocation5 + $0x90] sm:$0xff]
    %v674 = vld [vmem:[#allocation5 + $0x98] sm:$0xff]
    %v675 = vld [vmem:[#allocation5 + $0xa0] sm:$0xff]
    %v676 = vld [vmem:[#allocation5 + $0xa8] sm:$0xff]
    %v677 = vld [vmem:[#allocation5 + $0xb0] sm:$0xff]
    %v678 = vld [vmem:[#allocation5 + $0xb8] sm:$0xff]
    %v679 = vld [vmem:[#allocation5 + $0xc0] sm:$0xff]
    %v680 = vld [vmem:[#allocation5 + $0xc8] sm:$0xff]
    %v681 = vld [vmem:[#allocation5 + $0xd0] sm:$0xff]
    %v682 = vld [vmem:[#allocation5 + $0xd8] sm:$0xff]
    %v683 = vld [vmem:[#allocation5 + $0xe0] sm:$0xff]
    %v684 = vld [vmem:[#allocation5 + $0xe8] sm:$0xff]
    %v685 = vld [vmem:[#allocation5 + $0xf0] sm:$0xff]
    %v686 = vld [vmem:[#allocation5 + $0xf8] sm:$0xff]
    %v688 = vlaneseq
    %v689 = vshrl.u32 %v688, 7
    %v690 = vsub.s32 0, %v689
    %v691 = vrot.slane %v71, %v690
    %v692 = vlaneseq
    %v693 = vshrl.u32 %v692, 7
    %v694 = vsub.s32 1, %v693
    %v695 = vrot.slane %v71, %v694
    %v730 = vunpack.c.l.b16 %v655
    %v731 = vunpack.c.h.b16 %v655
    %v732 = vunpack.c.l.b16 %v656
    %v733 = vunpack.c.h.b16 %v656
    %v734 = vunpack.c.l.b16 %v657
    %v735 = vunpack.c.h.b16 %v657
    %v736 = vunpack.c.l.b16 %v658
    %v737 = vunpack.c.h.b16 %v658
    %v738 = vunpack.c.l.b16 %v659
    %v739 = vunpack.c.h.b16 %v659
    %v740 = vunpack.c.l.b16 %v660
    %v741 = vunpack.c.h.b16 %v660
    %v742 = vunpack.c.l.b16 %v661
    %v743 = vunpack.c.h.b16 %v661
    %v744 = vunpack.c.l.b16 %v662
    %v745 = vunpack.c.h.b16 %v662
    %v746 = vunpack.c.l.b16 %v663
    %v747 = vunpack.c.h.b16 %v663
    %v748 = vunpack.c.l.b16 %v664
    %v749 = vunpack.c.h.b16 %v664
    %v750 = vunpack.c.l.b16 %v665
    %v751 = vunpack.c.h.b16 %v665
    %v752 = vunpack.c.l.b16 %v666
    %v753 = vunpack.c.h.b16 %v666
    %v754 = vunpack.c.l.b16 %v667
    %v755 = vunpack.c.h.b16 %v667
    %v756 = vunpack.c.l.b16 %v668
    %v757 = vunpack.c.h.b16 %v668
    %v758 = vunpack.c.l.b16 %v669
    %v759 = vunpack.c.h.b16 %v669
    %v760 = vunpack.c.l.b16 %v670
    %v761 = vunpack.c.h.b16 %v670
    %v762 = vunpack.c.l.b16 %v671
    %v763 = vunpack.c.h.b16 %v671
    %v764 = vunpack.c.l.b16 %v672
    %v765 = vunpack.c.h.b16 %v672
    %v766 = vunpack.c.l.b16 %v673
    %v767 = vunpack.c.h.b16 %v673
    %v768 = vunpack.c.l.b16 %v674
    %v769 = vunpack.c.h.b16 %v674
    %v770 = vunpack.c.l.b16 %v675
    %v771 = vunpack.c.h.b16 %v675
    %v772 = vunpack.c.l.b16 %v676
    %v773 = vunpack.c.h.b16 %v676
    %v774 = vunpack.c.l.b16 %v677
    %v775 = vunpack.c.h.b16 %v677
    %v776 = vunpack.c.l.b16 %v678
    %v777 = vunpack.c.h.b16 %v678
    %v778 = vunpack.c.l.b16 %v679
    %v779 = vunpack.c.h.b16 %v679
    %v780 = vunpack.c.l.b16 %v680
    %v781 = vunpack.c.h.b16 %v680
    %v782 = vunpack.c.l.b16 %v681
    %v783 = vunpack.c.h.b16 %v681
    %v784 = vunpack.c.l.b16 %v682
    %v785 = vunpack.c.h.b16 %v682
    %v786 = vunpack.c.l.b16 %v683
    %v787 = vunpack.c.h.b16 %v683
    %v788 = vunpack.c.l.b16 %v684
    %v789 = vunpack.c.h.b16 %v684
    %v790 = vunpack.c.l.b16 %v685
    %v791 = vunpack.c.h.b16 %v685
    %v792 = vunpack.c.l.b16 %v686
    %v793 = vunpack.c.h.b16 %v686
    %v794 = vpack.c.b16 %v732, %v730
    %v795 = vpack.c.b16 %v733, %v731
    %v796 = vpack.c.b16 %v736, %v734
    %v797 = vpack.c.b16 %v737, %v735
    %v798 = vpack.c.b16 %v740, %v738
    %v799 = vpack.c.b16 %v741, %v739
    %v800 = vpack.c.b16 %v744, %v742
    %v801 = vpack.c.b16 %v745, %v743
    %v802 = vpack.c.b16 %v748, %v746
    %v803 = vpack.c.b16 %v749, %v747
    %v804 = vpack.c.b16 %v752, %v750
    %v805 = vpack.c.b16 %v753, %v751
    %v806 = vpack.c.b16 %v756, %v754
    %v807 = vpack.c.b16 %v757, %v755
    %v808 = vpack.c.b16 %v760, %v758
    %v809 = vpack.c.b16 %v761, %v759
    %v810 = vpack.c.b16 %v764, %v762
    %v811 = vpack.c.b16 %v765, %v763
    %v812 = vpack.c.b16 %v768, %v766
    %v813 = vpack.c.b16 %v769, %v767
    %v814 = vpack.c.b16 %v772, %v770
    %v815 = vpack.c.b16 %v773, %v771
    %v816 = vpack.c.b16 %v776, %v774
    %v817 = vpack.c.b16 %v777, %v775
    %v818 = vpack.c.b16 %v780, %v778
    %v819 = vpack.c.b16 %v781, %v779
    %v820 = vpack.c.b16 %v784, %v782
    %v821 = vpack.c.b16 %v785, %v783
    %v822 = vpack.c.b16 %v788, %v786
    %v823 = vpack.c.b16 %v789, %v787
    %v824 = vpack.c.b16 %v792, %v790
    %v825 = vpack.c.b16 %v793, %v791
    %858 = vmatprep.subr.bf16.mxu0 %v795
    %859 = vmatpush1.bf16.msra.mxu0 %v794
    %860 = vmatprep.subr.bf16.mxu0 %v797
    %861 = vmatpush1.bf16.msra.mxu0 %v796
    %862 = vmatprep.subr.bf16.mxu0 %v799
    %863 = vmatpush1.bf16.msra.mxu0 %v798
    %864 = vmatprep.subr.bf16.mxu0 %v801
    %865 = vmatpush1.bf16.msra.mxu0 %v800
    %866 = vmatprep.subr.bf16.mxu0 %v803
    %867 = vmatpush1.bf16.msra.mxu0 %v802
    %868 = vmatprep.subr.bf16.mxu0 %v805
    %869 = vmatpush1.bf16.msra.mxu0 %v804
    %870 = vmatprep.subr.bf16.mxu0 %v807
    %871 = vmatpush1.bf16.msra.mxu0 %v806
    %872 = vmatprep.subr.bf16.mxu0 %v809
    %873 = vmatpush1.bf16.msra.mxu0 %v808
    %874 = vmatprep.subr.bf16.mxu0 %v811
    %875 = vmatpush1.bf16.msra.mxu0 %v810
    %876 = vmatprep.subr.bf16.mxu0 %v813
    %877 = vmatpush1.bf16.msra.mxu0 %v812
    %878 = vmatprep.subr.bf16.mxu0 %v815
    %879 = vmatpush1.bf16.msra.mxu0 %v814
    %880 = vmatprep.subr.bf16.mxu0 %v817
    %881 = vmatpush1.bf16.msra.mxu0 %v816
    %882 = vmatprep.subr.bf16.mxu0 %v819
    %883 = vmatpush1.bf16.msra.mxu0 %v818
    %884 = vmatprep.subr.bf16.mxu0 %v821
    %885 = vmatpush1.bf16.msra.mxu0 %v820
    %886 = vmatprep.subr.bf16.mxu0 %v823
    %887 = vmatpush1.bf16.msra.mxu0 %v822
    %888 = vmatprep.subr.bf16.mxu0 %v825
    %889 = vmatpush1.bf16.msra.mxu0 %v824
    %890 = vmatprep.mubr.bf16.mxu0 %v654
    %891 = vmatmul.mubr.bf16.gmra.mrb[0].mxu0 %v653
    %v892 = vpop.f32.mrb[0].mxu0
    %v893 = vadd.f32 %v691, %v892
    %v894 = vpop.f32.mrb[0].mxu0
    %v895 = vadd.f32 %v695, %v894
    %v896 = vpop.f32.mrb[0].mxu0
    %v897 = vpop.f32.mrb[0].mxu0
    %898 = vdwg.mxu0
    %v899 = vmax.f32 %v893, 0.0
    %v900 = vmax.f32 %v895, 0.0
    %v901 = vpack.c.bf16 %v899, %v899
    %v902 = vpack.c.bf16 %v900, %v900
    %v903 = vld [vmem:[%s9] sm:$0xf]
    %v904 = vld [vmem:[%s9 + $0x4] sm:$0xf]
    %v905 = vld [vmem:[%s9 + $0x8] sm:$0xf]
    %v906 = vld [vmem:[%s9 + $0xc] sm:$0xf]
    %v907 = vld [vmem:[%s9 + $0x10] sm:$0xf]
    %v908 = vld [vmem:[%s9 + $0x14] sm:$0xf]
    %v909 = vld [vmem:[%s9 + $0x18] sm:$0xf]
    %v910 = vld [vmem:[%s9 + $0x1c] sm:$0xf]
    %v911 = vld [vmem:[%s9 + $0x20] sm:$0xf]
    %v912 = vld [vmem:[%s9 + $0x24] sm:$0xf]
    %v913 = vld [vmem:[%s9 + $0x28] sm:$0xf]
    %v914 = vld [vmem:[%s9 + $0x2c] sm:$0xf]
    %v915 = vld [vmem:[%s9 + $0x30] sm:$0xf]
    %v916 = vld [vmem:[%s9 + $0x34] sm:$0xf]
    %v917 = vld [vmem:[%s9 + $0x38] sm:$0xf]
    %v918 = vld [vmem:[%s9 + $0x3c] sm:$0xf]
    %v919 = vld [vmem:[%s9 + $0x40] sm:$0xf]
    %v920 = vld [vmem:[%s9 + $0x44] sm:$0xf]
    %v921 = vld [vmem:[%s9 + $0x48] sm:$0xf]
    %v922 = vld [vmem:[%s9 + $0x4c] sm:$0xf]
    %v923 = vld [vmem:[%s9 + $0x50] sm:$0xf]
    %v924 = vld [vmem:[%s9 + $0x54] sm:$0xf]
    %v925 = vld [vmem:[%s9 + $0x58] sm:$0xf]
    %v926 = vld [vmem:[%s9 + $0x5c] sm:$0xf]
    %v927 = vld [vmem:[%s9 + $0x60] sm:$0xf]
    %v928 = vld [vmem:[%s9 + $0x64] sm:$0xf]
    %v929 = vld [vmem:[%s9 + $0x68] sm:$0xf]
    %v930 = vld [vmem:[%s9 + $0x6c] sm:$0xf]
    %v931 = vld [vmem:[%s9 + $0x70] sm:$0xf]
    %v932 = vld [vmem:[%s9 + $0x74] sm:$0xf]
    %v933 = vld [vmem:[%s9 + $0x78] sm:$0xf]
    %v934 = vld [vmem:[%s9 + $0x7c] sm:$0xf]
    %v936 = vlaneseq
    %v937 = vshrl.u32 %v936, 7
    %v938 = vsub.s32 0, %v937
    %v939 = vrot.slane %v72, %v938
    %v973 = vunpack.c.l.b16 %v903
    %v974 = vunpack.c.l.b16 %v904
    %v975 = vunpack.c.l.b16 %v905
    %v976 = vunpack.c.l.b16 %v906
    %v977 = vunpack.c.l.b16 %v907
    %v978 = vunpack.c.l.b16 %v908
    %v979 = vunpack.c.l.b16 %v909
    %v980 = vunpack.c.l.b16 %v910
    %v981 = vunpack.c.l.b16 %v911
    %v982 = vunpack.c.l.b16 %v912
    %v983 = vunpack.c.l.b16 %v913
    %v984 = vunpack.c.l.b16 %v914
    %v985 = vunpack.c.l.b16 %v915
    %v986 = vunpack.c.l.b16 %v916
    %v987 = vunpack.c.l.b16 %v917
    %v988 = vunpack.c.l.b16 %v918
    %v989 = vunpack.c.l.b16 %v919
    %v990 = vunpack.c.l.b16 %v920
    %v991 = vunpack.c.l.b16 %v921
    %v992 = vunpack.c.l.b16 %v922
    %v993 = vunpack.c.l.b16 %v923
    %v994 = vunpack.c.l.b16 %v924
    %v995 = vunpack.c.l.b16 %v925
    %v996 = vunpack.c.l.b16 %v926
    %v997 = vunpack.c.l.b16 %v927
    %v998 = vunpack.c.l.b16 %v928
    %v999 = vunpack.c.l.b16 %v929
    %v1000 = vunpack.c.l.b16 %v930
    %v1001 = vunpack.c.l.b16 %v931
    %v1002 = vunpack.c.l.b16 %v932
    %v1003 = vunpack.c.l.b16 %v933
    %v1004 = vunpack.c.l.b16 %v934
    %v1005 = vpack.c.b16 %v974, %v973
    %v1006 = vpack.c.b16 %v976, %v975
    %v1007 = vpack.c.b16 %v978, %v977
    %v1008 = vpack.c.b16 %v980, %v979
    %v1009 = vpack.c.b16 %v982, %v981
    %v1010 = vpack.c.b16 %v984, %v983
    %v1011 = vpack.c.b16 %v986, %v985
    %v1012 = vpack.c.b16 %v988, %v987
    %v1013 = vpack.c.b16 %v990, %v989
    %v1014 = vpack.c.b16 %v992, %v991
    %v1015 = vpack.c.b16 %v994, %v993
    %v1016 = vpack.c.b16 %v996, %v995
    %v1017 = vpack.c.b16 %v998, %v997
    %v1018 = vpack.c.b16 %v1000, %v999
    %v1019 = vpack.c.b16 %v1002, %v1001
    %v1020 = vpack.c.b16 %v1004, %v1003
    %1037 = vmatprep.subr.bf16.mxu0 0
    %1038 = vmatpush1.bf16.msra.mxu0 %v1005
    %1039 = vmatprep.subr.bf16.mxu0 0
    %1040 = vmatpush1.bf16.msra.mxu0 %v1006
    %1041 = vmatprep.subr.bf16.mxu0 0
    %1042 = vmatpush1.bf16.msra.mxu0 %v1007
    %1043 = vmatprep.subr.bf16.mxu0 0
    %1044 = vmatpush1.bf16.msra.mxu0 %v1008
    %1045 = vmatprep.subr.bf16.mxu0 0
    %1046 = vmatpush1.bf16.msra.mxu0 %v1009
    %1047 = vmatprep.subr.bf16.mxu0 0
    %1048 = vmatpush1.bf16.msra.mxu0 %v1010
    %1049 = vmatprep.subr.bf16.mxu0 0
    %1050 = vmatpush1.bf16.msra.mxu0 %v1011
    %1051 = vmatprep.subr.bf16.mxu0 0
    %1052 = vmatpush1.bf16.msra.mxu0 %v1012
    %1053 = vmatprep.subr.bf16.mxu0 0
    %1054 = vmatpush1.bf16.msra.mxu0 %v1013
    %1055 = vmatprep.subr.bf16.mxu0 0
    %1056 = vmatpush1.bf16.msra.mxu0 %v1014
    %1057 = vmatprep.subr.bf16.mxu0 0
    %1058 = vmatpush1.bf16.msra.mxu0 %v1015
    %1059 = vmatprep.subr.bf16.mxu0 0
    %1060 = vmatpush1.bf16.msra.mxu0 %v1016
    %1061 = vmatprep.subr.bf16.mxu0 0
    %1062 = vmatpush1.bf16.msra.mxu0 %v1017
    %1063 = vmatprep.subr.bf16.mxu0 0
    %1064 = vmatpush1.bf16.msra.mxu0 %v1018
    %1065 = vmatprep.subr.bf16.mxu0 0
    %1066 = vmatpush1.bf16.msra.mxu0 %v1019
    %1067 = vmatprep.subr.bf16.mxu0 0
    %1068 = vmatpush1.bf16.msra.mxu0 %v1020
    %1069 = vmatprep.mubr.bf16.mxu0 %v902
    %1070 = vmatmul.mubr.bf16.gmra.mrb[0].mxu0 %v901
    %v1071 = vpop.f32.mrb[0].mxu0
    %v1072 = vadd.f32 %v939, %v1071
    %v1073 = vpop.f32.mrb[0].mxu0
    %v1074 = vpop.f32.mrb[0].mxu0
    %v1075 = vpop.f32.mrb[0].mxu0
    %1076 = vdwg.mxu0
    %1077 = vst [vmem:[#allocation7] sm:$0xff] %v1072
    // Predicated region
    $region54: #{qnetwork_forward.1} parent=1 // pred_check
      _
    $region55: #{qnetwork_forward.1} parent=1 // pred_check_branch
      %1079 = sbr.rel (0) target = $region57
    $region56: #{qnetwork_forward.1} parent=1 // pred_region
      %s1081 = ssub.s32 128, 128
      %1082 = vsyncadd [#allocation4], %s1081
      %s1084 = sshll.u32 [#allocation7], 4
      %s1085 = int_to_ptr.vmem [resolvable:$true] %s1084
      %1087 = dma.vmem_to_hbm [thread:$0]  %s1085, 128, %s11, [#allocation4]
    $region57: #{qnetwork_forward.1} parent=1 // pred_fallthru
      _
    // Predicated region
    $region58: #{qnetwork_forward.1} parent=1 // pred_check
      _
    $region59: #{qnetwork_forward.1} parent=1 // pred_check_branch
      %1089 = sbr.rel (0) target = $region61
    $region60: #{qnetwork_forward.1} parent=1 // pred_region
      %1090 = dma.done [#allocation4], 128
    $region61: #{qnetwork_forward.1} parent=1 // pred_fallthru
      _
    %1091 = vsyncpa [#allocation3], 1
    %1092 = vsyncpa [#allocation6], 1
    %1093 = vsyncpa [#allocation4], 1

</llo_original>
